<compile_context>
chip_gen: v5e
topology: v5e:2x2
jax: 0.10.0
libtpu: 0.0.40
codegen_flags: <defaults>
</compile_context>

<pallas_src>
import functools
import numpy as np
import jax
import jax.numpy as jnp
from jax.experimental import pallas as pl
from jax.experimental.pallas import tpu as pltpu


# =============================================================================
# Pallas kernel
#
# layout:
#   heatmaps : (B, V, J, H*W)      per-view NCHW heatmaps, spatial flattened
#                                  row-major (idx = h*W + w)
#   coords   : (B, V, 3, NB_pad)   rows: px, py, bnd  (pixel-space sample coords
#                                  in grid_sample align_corners=True convention,
#                                  and 0/1 visibility mask)
#   bsum     : (B, 1, NB_pad)      sum of bnd over views (precomputed)
#   output   : (B, J, NB_pad) f32  (sliced/reshaped outside to (B, J, cx, cy, cz))
# grid = (B, NB_tiles, V);  V is the reduction axis accumulated in VMEM scratch.
# =============================================================================
def _project_kernel(hm_ref, coord_ref, bsum_ref, out_ref, acc_ref,
                    *, H, W, n_views, use_bf16):
    v = pl.program_id(2)

    @pl.when(v == 0)
    def _init():
        acc_ref[...] = jnp.zeros_like(acc_ref)

    hm = hm_ref[...]                     # (J, H*W)
    coords = coord_ref[...]              # (3, NB_tile)
    px = coords[0:1, :]                  # (1, NB_tile)  -> W axis
    py = coords[1:2, :]                  # (1, NB_tile)  -> H axis
    bnd = coords[2:3, :]                 # (1, NB_tile)  0/1 visibility

    nb = px.shape[-1]

    # Separable bilinear weights: wy over H rows, wx over W cols (tiny iotas,
    # no integer div/mod, no full-size (H*W, NB) elementwise passes).
    h_idx = jax.lax.broadcasted_iota(jnp.int32, (H, nb), 0).astype(jnp.float32)
    w_idx = jax.lax.broadcasted_iota(jnp.int32, (W, nb), 0).astype(jnp.float32)
    wy = jnp.maximum(0.0, 1.0 - jnp.abs(py - h_idx))      # (H, NB)
    wx = jnp.maximum(0.0, 1.0 - jnp.abs(px - w_idx))      # (W, NB)

    if use_bf16:
        wy = wy.astype(jnp.bfloat16)
        wx = wx.astype(jnp.bfloat16)
        hm = hm.astype(jnp.bfloat16)

    # One broadcast-multiply materializes the dense weight matrix.
    # Out-of-image corners never get weight, reproducing zeros padding exactly.
    wmat = (wy[:, None, :] * wx[None, :, :]).reshape(H * W, nb)

    sampled = jnp.dot(hm, wmat, preferred_element_type=jnp.float32)   # (J, NB)
    # bnd broadcasts over the contraction axis -> mask after the matmul.
    acc_ref[...] += sampled * bnd

    @pl.when(v == n_views - 1)
    def _finalize():
        inv = pl.reciprocal(bsum_ref[...] + 1e-6, approx=True)        # (1, NB)
        out_ref[...] = jnp.clip(acc_ref[...] * inv, 0.0, 1.0)


def _use_bf16_matmul():
    # bf16 at the MXU on v6e/v7x (full-rate bf16, bf16 VPU supported);
    # keep f32 end-to-end on v5e/v4 (no bf16 VPU -> casts just add work).
    try:
        kind = jax.devices()[0].device_kind.lower()
    except Exception:
        return False
    return ("v6" in kind) or ("v7" in kind)


def _pick_nb_tile(hw, nbins, use_bf16, wmat_budget_bytes=8 << 20):
    # Size the NBINS tile so the (HW, NB_tile) weight intermediate stays within
    # a small VMEM budget (safe for v7x's 64 MiB VMEM as well as v5e/v6e).
    el = 2 if use_bf16 else 4
    cap = (wmat_budget_bytes // max(1, hw * el)) // 128 * 128
    cap = max(128, min(cap, 2048))
    nb_round = ((nbins + 127) // 128) * 128
    return min(cap, nb_round)


def fused_masked_grid_sample(heatmaps_flat, coords, *, H, W):
    """heatmaps_flat: (B, V, J, H*W); coords: (B, V, 3, NBINS) rows px/py/bnd."""
    B, V, J, HW = heatmaps_flat.shape
    nbins = coords.shape[-1]

    use_bf16 = _use_bf16_matmul()
    nb_tile = _pick_nb_tile(HW, nbins, use_bf16)
    n_tiles = pl.cdiv(nbins, nb_tile)
    nb_pad = n_tiles * nb_tile

    if nb_pad != nbins:
        coords = jnp.pad(coords, ((0, 0), (0, 0), (0, 0), (0, nb_pad - nbins)))

    # Per-view visibility sum is trivially cheap -> plain JAX, indexed by b only.
    bsum = jnp.sum(coords[:, :, 2:3, :], axis=1)           # (B, 1, NB_pad)

    kernel = functools.partial(_project_kernel, H=H, W=W, n_views=V,
                               use_bf16=use_bf16)
    out = pl.pallas_call(
        kernel,
        out_shape=jax.ShapeDtypeStruct((B, J, nb_pad), jnp.float32),
        grid_spec=pltpu.PrefetchScalarGridSpec(
            num_scalar_prefetch=0,
            grid=(B, n_tiles, V),
            in_specs=[
                pl.BlockSpec((None, None, J, HW), lambda b, t, c: (b, c, 0, 0)),
                pl.BlockSpec((None, None, 3, nb_tile), lambda b, t, c: (b, c, 0, t)),
                pl.BlockSpec((None, 1, nb_tile), lambda b, t, c: (b, 0, t)),
            ],
            out_specs=pl.BlockSpec((None, J, nb_tile), lambda b, t, c: (b, 0, t)),
            scratch_shapes=[pltpu.VMEM((J, nb_tile), jnp.float32)],
        ),
        compiler_params=pltpu.CompilerParams(
            dimension_semantics=("parallel", "parallel", "arbitrary")),
    )(heatmaps_flat, coords, bsum)

    if nb_pad != nbins:
        out = out[:, :, :nbins]
    return out


# =============================================================================
# Plain-JAX glue (camera projection, affine transform, grid construction)
# =============================================================================
def project_pose(grid, cam):
    # Simple pinhole model.
    # TODO(synk): radial/tangential distortion of cameras.project_pose not implemented.
    R = jnp.asarray(cam['R'], jnp.float32)
    T = jnp.asarray(cam['T'], jnp.float32)
    f = jnp.asarray(cam['f'], jnp.float32)
    c = jnp.asarray(cam['c'], jnp.float32)
    xcam = (grid - T[None, :]) @ R.T
    y = xcam[:, :2] / (xcam[:, 2:3] + 1e-5)
    return y * f[None, :] + c[None, :]


def get_transform(center, scale, rot, res):
    # TODO(synk): rotation branch of get_transform omitted (rotation=0 in this test).
    h = 200.0 * float(scale)
    t = np.eye(3, dtype=np.float32)
    t[0, 0] = res[0] / h
    t[1, 1] = res[1] / h
    t[0, 2] = res[0] * (-float(center[0]) / h + 0.5)
    t[1, 2] = res[1] * (-float(center[1]) / h + 0.5)
    return jnp.asarray(t)


def do_transform(xy, trans):
    ones = jnp.ones((xy.shape[0], 1), xy.dtype)
    return (jnp.concatenate([xy, ones], axis=1) @ trans.T)[:, :2]


class ProjectLayer:
    def __init__(self, img_size, heatmap_size):
        self.img_size = img_size          # (W_img, H_img)
        self.heatmap_size = heatmap_size  # (w, h)

    def compute_grid(self, box_size, box_center, n_bins):
        if isinstance(box_size, (int, float)):
            box_size = [box_size] * 3
        if isinstance(n_bins, int):
            n_bins = [n_bins] * 3
        g1x = jnp.linspace(-box_size[0] / 2, box_size[0] / 2, n_bins[0]) + box_center[0]
        g1y = jnp.linspace(-box_size[1] / 2, box_size[1] / 2, n_bins[1]) + box_center[1]
        g1z = jnp.linspace(-box_size[2] / 2, box_size[2] / 2, n_bins[2]) + box_center[2]
        gx, gy, gz = jnp.meshgrid(g1x, g1y, g1z, indexing="ij")
        return jnp.stack([gx.reshape(-1), gy.reshape(-1), gz.reshape(-1)],
                         axis=1).astype(jnp.float32)

    def _prepare(self, heatmaps, meta, grid_size, grid_center, cube_size, flip_xcoords):
        n_views = len(heatmaps)
        B, J, H, W = heatmaps[0].shape
        nbins = cube_size[0] * cube_size[1] * cube_size[2]
        w_hm, h_hm = self.heatmap_size

        grids, coords = [], []
        for i in range(B):
            valid = (len(grid_center[0]) == 3) or (float(grid_center[i][3]) >= 0)
            gc = grid_center[0] if len(grid_center) == 1 else grid_center[i]
            grid = self.compute_grid(grid_size, gc, cube_size) if valid else \
                jnp.zeros((nbins, 3), jnp.float32)
            grids.append(grid)

            coords_i = []
            for c in range(n_views):
                if not valid:
                    coords_i.append(jnp.zeros((3, nbins), jnp.float32))
                    continue
                center = np.asarray(meta[c]['center'][i], np.float32)
                width, height = float(center[0]) * 2.0, float(center[1]) * 2.0
                scale = meta[c]['scale'][i]
                rotation = meta[c]['rotation'][i]
                trans = get_transform(center, scale, rotation, self.img_size)
                cam = meta[c]['camera']
                xy = project_pose(grid, cam)
                mask = ((xy[:, 0] >= 0) & (xy[:, 1] >= 0) &
                        (xy[:, 0] < width) & (xy[:, 1] < height)).astype(jnp.float32)
                xy = jnp.clip(xy, -1.0, max(width, height))
                xy = do_transform(xy, trans)
                if flip_xcoords is not None and flip_xcoords[i]:
                    xy = xy.at[:, 0].set(self.img_size[0] - xy[:, 0])
                xy = xy * jnp.array([w_hm, h_hm], jnp.float32) / \
                    jnp.array(self.img_size, jnp.float32)
                sg = xy / jnp.array([w_hm - 1, h_hm - 1], jnp.float32) * 2.0 - 1.0
                sg = jnp.clip(sg, -1.1, 1.1)
                # grid_sample(align_corners=True) normalized -> pixel coords
                px = (sg[:, 0] + 1.0) * 0.5 * (W - 1)
                py = (sg[:, 1] + 1.0) * 0.5 * (H - 1)
                coords_i.append(jnp.stack([px, py, mask]))     # (3, nbins)
            coords.append(jnp.stack(coords_i))                 # (V, 3, nbins)

        grids = jnp.stack(grids)                               # (B, nbins, 3)
        coords = jnp.stack(coords)                             # (B, V, 3, nbins)
        hm_flat = jnp.stack(heatmaps, axis=1).reshape(B, n_views, J, H * W)
        return hm_flat, coords, grids

    def get_voxel(self, heatmaps, meta, grid_size, grid_center, cube_size,
                  flip_xcoords=None):
        B, J, H, W = heatmaps[0].shape
        hm_flat, coords, grids = self._prepare(
            heatmaps, meta, grid_size, grid_center, cube_size, flip_xcoords)
        cubes = fused_masked_grid_sample(hm_flat, coords, H=H, W=W)
        cubes = cubes.reshape(B, J, cube_size[0], cube_size[1], cube_size[2])
        return cubes, grids

    def __call__(self, heatmaps, meta, grid_size, grid_center, cube_size,
                 flip_xcoords=None):
        return self.get_voxel(heatmaps, meta, grid_size, grid_center, cube_size,
                              flip_xcoords=flip_xcoords)


# =============================================================================
# Deterministic synthetic setup + run
# =============================================================================
def make_camera(angle, radius=2000.0):
    target = np.array([0.0, 0.0, 800.0], np.float32)
    pos = np.array([radius * np.cos(angle), radius * np.sin(angle), 800.0], np.float32)
    z_axis = target - pos
    z_axis = z_axis / np.linalg.norm(z_axis)
    up = np.array([0.0, 0.0, 1.0], np.float32)
    x_axis = np.cross(up, z_axis)
    x_axis = x_axis / np.linalg.norm(x_axis)
    y_axis = np.cross(z_axis, x_axis)
    R = np.stack([x_axis, y_axis, z_axis], axis=0).astype(np.float32)
    return {'R': R, 'T': pos,
            'f': np.array([100.0, 100.0], np.float32),
            'c': np.array([32.0, 32.0], np.float32)}


def reference_cubes(hm_flat, coords, H, W):
    px = coords[:, :, 0:1, :]                               # (B, V, 1, NB)
    py = coords[:, :, 1:2, :]
    bnd = coords[:, :, 2:3, :]
    idx = np.arange(H * W)
    h_f = jnp.asarray(idx // W, jnp.float32)[None, None, :, None]
    w_f = jnp.asarray(idx % W, jnp.float32)[None, None, :, None]
    wy = jnp.maximum(0.0, 1.0 - jnp.abs(py - h_f))
    wx = jnp.maximum(0.0, 1.0 - jnp.abs(px - w_f))
    wmat = wy * wx * bnd                                    # (B, V, HW, NB)
    sampled = jnp.einsum('bvjh,bvhn->bjn', hm_flat, wmat)   # (B, J, NB)
    bsum = jnp.sum(bnd, axis=1)                             # (B, 1, NB)
    cubes = sampled / (bsum + 1e-6)
    return jnp.clip(jnp.nan_to_num(cubes), 0.0, 1.0)


if __name__ == "__main__":
    key = jax.random.PRNGKey(0)
    B, V, J = 2, 3, 8
    heatmap_size = (16, 16)        # (w, h)
    img_size = (64, 64)
    cube_size = (8, 8, 8)
    grid_size = [800.0, 800.0, 800.0]
    grid_center = [[0.0, 0.0, 800.0]]

    keys = jax.random.split(key, V)
    heatmaps = [jax.random.uniform(keys[c], (B, J, heatmap_size[1], heatmap_size[0]),
                                   dtype=jnp.float32) for c in range(V)]

    meta = []
    for c in range(V):
        meta.append({
            'center': np.stack([np.array([32.0 + i, 32.0], np.float32)
                                for i in range(B)]),
            'scale': np.array([0.32 + 0.02 * i for i in range(B)], np.float32),
            'rotation': np.zeros((B,), np.float32),
            'camera': make_camera(2.0 * np.pi * c / V),
        })

    layer = ProjectLayer(img_size, heatmap_size)
    cubes, grids = layer(heatmaps, meta, grid_size, grid_center, cube_size)
    cubes = jax.block_until_ready(cubes)
    grids = jax.block_until_ready(grids)

    assert cubes.shape == (B, J, *cube_size)
    assert grids.shape == (B, cube_size[0] * cube_size[1] * cube_size[2], 3)

    # Sanity check the Pallas hot path against a plain-JAX reference.
    hm_flat, coords, _ = layer._prepare(
        heatmaps, meta, grid_size, grid_center, cube_size, None)
    ref = jax.block_until_ready(
        reference_cubes(hm_flat, coords, heatmap_size[1], heatmap_size[0]))
    np.testing.assert_allclose(np.asarray(cubes).reshape(B, J, -1),
                               np.asarray(ref), atol=2e-2, rtol=0)

    print("KERNEL_OK")
</pallas_src>

<mosaic_0001>
module attributes {stable_mosaic.version = 11 : i64} {
  func.func @_project_kernel(%arg0: i32, %arg1: i32, %arg2: i32, %arg3: memref<1x1x8x256xf32, #tpu.memory_space<vmem>>, %arg4: memref<1x1x3x512xf32, #tpu.memory_space<vmem>>, %arg5: memref<1x1x512xf32, #tpu.memory_space<vmem>>, %arg6: memref<1x8x512xf32, #tpu.memory_space<vmem>>, %arg7: memref<8x512xf32, #tpu.memory_space<vmem>>) attributes {dimension_semantics = [#tpu.dimension_semantics<parallel>, #tpu.dimension_semantics<parallel>, #tpu.dimension_semantics<arbitrary>], iteration_bounds = array<i64: 2, 1, 3>, scalar_prefetch = 0 : i64, scratch_operands = 1 : i64, tpu.core_type = #tpu.core_type<tc>, window_params = [{transform_indices = @transform_0, window_bounds = array<i64: 1, 1, 8, 256>}, {transform_indices = @transform_1, window_bounds = array<i64: 1, 1, 3, 512>}, {transform_indices = @transform_2, window_bounds = array<i64: 1, 1, 512>}, {transform_indices = @transform_3, window_bounds = array<i64: 1, 8, 512>}]} {
    %c0_i32 = arith.constant 0 : i32
    %0 = arith.cmpi eq, %arg2, %c0_i32 : i32
    %1 = arith.extui %0 : i1 to i32
    %c0_i32_0 = arith.constant 0 : i32
    %2 = arith.cmpi ne, %1, %c0_i32_0 : i32
    scf.if %2 {
      %cst_17 = arith.constant 0.000000e+00 : f32
      %43 = vector.broadcast %cst_17 : f32 to vector<8x512xf32>
      %c0_18 = arith.constant 0 : index
      %c0_19 = arith.constant 0 : index
      %44 = vector.load %arg7[%c0_18, %c0_19] : memref<8x512xf32, #tpu.memory_space<vmem>>, vector<8x512xf32>
      tpu.vector_store %arg7[%c0_18, %c0_19], %43 {strides = array<i32>} : memref<8x512xf32, #tpu.memory_space<vmem>>, vector<8x512xf32>,
    } else {
    }
    %c0 = arith.constant 0 : index
    %c0_1 = arith.constant 0 : index
    %c0_2 = arith.constant 0 : index
    %c0_3 = arith.constant 0 : index
    %3 = vector.load %arg3[%c0, %c0_1, %c0_2, %c0_3] : memref<1x1x8x256xf32, #tpu.memory_space<vmem>>, vector<1x1x8x256xf32>
    %4 = vector.shape_cast %3 : vector<1x1x8x256xf32> to vector<8x256xf32>
    %c0_4 = arith.constant 0 : index
    %c0_5 = arith.constant 0 : index
    %c0_6 = arith.constant 0 : index
    %c0_7 = arith.constant 0 : index
    %5 = vector.load %arg4[%c0_4, %c0_5, %c0_6, %c0_7] : memref<1x1x3x512xf32, #tpu.memory_space<vmem>>, vector<1x1x3x512xf32>
    %6 = vector.shape_cast %5 : vector<1x1x3x512xf32> to vector<3x512xf32>
    %7 = vector.extract_strided_slice %6 {offsets = [0, 0], sizes = [1, 512], strides = [1, 1]} : vector<3x512xf32> to vector<1x512xf32>
    %8 = vector.extract_strided_slice %6 {offsets = [1, 0], sizes = [1, 512], strides = [1, 1]} : vector<3x512xf32> to vector<1x512xf32>
    %9 = vector.extract_strided_slice %6 {offsets = [2, 0], sizes = [1, 512], strides = [1, 1]} : vector<3x512xf32> to vector<1x512xf32>
    %10 = tpu.iota {dimensions = array<i32: 0>} : vector<16x512xi32>
    %11 = arith.sitofp %10 : vector<16x512xi32> to vector<16x512xf32>
    %12 = tpu.iota {dimensions = array<i32: 0>} : vector<16x512xi32>
    %13 = arith.sitofp %12 : vector<16x512xi32> to vector<16x512xf32>
    %14 = vector.broadcast %8 : vector<1x512xf32> to vector<16x512xf32>
    %15 = arith.subf %14, %11 : vector<16x512xf32>
    %16 = math.absf %15 : vector<16x512xf32>
    %cst = arith.constant 1.000000e+00 : f32
    %17 = vector.broadcast %cst : f32 to vector<16x512xf32>
    %18 = arith.subf %17, %16 : vector<16x512xf32>
    %cst_8 = arith.constant 0.000000e+00 : f32
    %19 = vector.broadcast %cst_8 : f32 to vector<16x512xf32>
    %20 = arith.maximumf %19, %18 : vector<16x512xf32>
    %21 = vector.broadcast %7 : vector<1x512xf32> to vector<16x512xf32>
    %22 = arith.subf %21, %13 : vector<16x512xf32>
    %23 = math.absf %22 : vector<16x512xf32>
    %cst_9 = arith.constant 1.000000e+00 : f32
    %24 = vector.broadcast %cst_9 : f32 to vector<16x512xf32>
    %25 = arith.subf %24, %23 : vector<16x512xf32>
    %cst_10 = arith.constant 0.000000e+00 : f32
    %26 = vector.broadcast %cst_10 : f32 to vector<16x512xf32>
    %27 = arith.maximumf %26, %25 : vector<16x512xf32>
    %28 = vector.shape_cast %20 : vector<16x512xf32> to vector<16x1x512xf32>
    %29 = vector.shape_cast %27 : vector<16x512xf32> to vector<1x16x512xf32>
    %30 = vector.broadcast %28 : vector<16x1x512xf32> to vector<16x16x512xf32>
    %31 = vector.broadcast %29 : vector<1x16x512xf32> to vector<16x16x512xf32>
    %32 = arith.mulf %30, %31 : vector<16x16x512xf32>
    %33 = vector.shape_cast %32 : vector<16x16x512xf32> to vector<256x512xf32>
    %cst_11 = arith.constant dense<0.000000e+00> : vector<8x512xf32>
    %34 = tpu.matmul %4, %33, %cst_11 {dimension_numbers = #tpu.dot_dimension_numbers<[1], [0], [0], [1], [0, 0, 1, 1], [], []>} : vector<8x256xf32>, vector<256x512xf32>, vector<8x512xf32> -> vector<8x512xf32>
    %c0_12 = arith.constant 0 : index
    %c0_13 = arith.constant 0 : index
    %35 = vector.load %arg7[%c0_12, %c0_13] : memref<8x512xf32, #tpu.memory_space<vmem>>, vector<8x512xf32>
    %36 = vector.broadcast %9 : vector<1x512xf32> to vector<8x512xf32>
    %37 = arith.mulf %34, %36 : vector<8x512xf32>
    %38 = arith.addf %35, %37 : vector<8x512xf32>
    %c0_14 = arith.constant 0 : index
    %c0_15 = arith.constant 0 : index
    %39 = vector.load %arg7[%c0_14, %c0_15] : memref<8x512xf32, #tpu.memory_space<vmem>>, vector<8x512xf32>
    tpu.vector_store %arg7[%c0_14, %c0_15], %38 {strides = array<i32>} : memref<8x512xf32, #tpu.memory_space<vmem>>, vector<8x512xf32>,
    %c2_i32 = arith.constant 2 : i32
    %40 = arith.cmpi eq, %arg2, %c2_i32 : i32
    %41 = arith.extui %40 : i1 to i32
    %c0_i32_16 = arith.constant 0 : i32
    %42 = arith.cmpi ne, %41, %c0_i32_16 : i32
    scf.if %42 {
      %c0_17 = arith.constant 0 : index
      %c0_18 = arith.constant 0 : index
      %c0_19 = arith.constant 0 : index
      %43 = vector.load %arg5[%c0_17, %c0_18, %c0_19] : memref<1x1x512xf32, #tpu.memory_space<vmem>>, vector<1x1x512xf32>
      %44 = vector.shape_cast %43 : vector<1x1x512xf32> to vector<1x512xf32>
      %cst_20 = arith.constant 9.99999997E-7 : f32
      %45 = vector.broadcast %cst_20 : f32 to vector<1x512xf32>
      %46 = arith.addf %44, %45 : vector<1x512xf32>
      %47 = tpu.reciprocal %46 {approx = true} : vector<1x512xf32> -> vector<1x512xf32>
      %c0_21 = arith.constant 0 : index
      %c0_22 = arith.constant 0 : index
      %48 = vector.load %arg7[%c0_21, %c0_22] : memref<8x512xf32, #tpu.memory_space<vmem>>, vector<8x512xf32>
      %49 = vector.broadcast %47 : vector<1x512xf32> to vector<8x512xf32>
      %50 = arith.mulf %48, %49 : vector<8x512xf32>
      %cst_23 = arith.constant 0.000000e+00 : f32
      %cst_24 = arith.constant 1.000000e+00 : f32
      %51 = vector.broadcast %cst_23 : f32 to vector<8x512xf32>
      %52 = arith.maximumf %51, %50 : vector<8x512xf32>
      %53 = vector.broadcast %cst_24 : f32 to vector<8x512xf32>
      %54 = arith.minimumf %53, %52 : vector<8x512xf32>
      %c0_25 = arith.constant 0 : index
      %c0_26 = arith.constant 0 : index
      %c0_27 = arith.constant 0 : index
      %55 = vector.load %arg6[%c0_25, %c0_26, %c0_27] : memref<1x8x512xf32, #tpu.memory_space<vmem>>, vector<1x8x512xf32>
      %56 = vector.shape_cast %55 : vector<1x8x512xf32> to vector<8x512xf32>
      %57 = vector.shape_cast %54 : vector<8x512xf32> to vector<1x8x512xf32>
      tpu.vector_store %arg6[%c0_25, %c0_26, %c0_27], %57 {strides = array<i32>} : memref<1x8x512xf32, #tpu.memory_space<vmem>>, vector<1x8x512xf32>,
    } else {
    }
    return
  }
  func.func @transform_0(%arg0: i32, %arg1: i32, %arg2: i32) -> (i32, i32, i32, i32) {
    %c0_i32 = arith.constant 0 : i32
    %c0_i32_0 = arith.constant 0 : i32
    %c0_i32_1 = arith.constant 0 : i32
    return %arg0, %arg2, %c0_i32, %c0_i32_0 : i32, i32, i32, i32
  }
  func.func @transform_1(%arg0: i32, %arg1: i32, %arg2: i32) -> (i32, i32, i32, i32) {
    %c0_i32 = arith.constant 0 : i32
    %c0_i32_0 = arith.constant 0 : i32
    return %arg0, %arg2, %c0_i32, %arg1 : i32, i32, i32, i32
  }
  func.func @transform_2(%arg0: i32, %arg1: i32, %arg2: i32) -> (i32, i32, i32) {
    %c0_i32 = arith.constant 0 : i32
    %c0_i32_0 = arith.constant 0 : i32
    return %arg0, %c0_i32, %arg1 : i32, i32, i32
  }
  func.func @transform_3(%arg0: i32, %arg1: i32, %arg2: i32) -> (i32, i32, i32) {
    %c0_i32 = arith.constant 0 : i32
    %c0_i32_0 = arith.constant 0 : i32
    return %arg0, %c0_i32, %arg1 : i32, i32, i32
  }
}

</mosaic_0001>

<llo_original>
// kernel: tpu_custom_call.1
$region0: #{tpu_custom_call.1}
  #allocation0 [shape = 'u32[]', space=smem, size = 0x4, offset = 0x4, fixed_abs, tag = 'smem constant byte address 0x4 - core index']
  #allocation1 [shape = 'u32[72,128]{1,0:T(1,128)}', space=vmem, size = 0x9000, scoped, tag = 'internal scratch']
  #allocation2 [shape = 'f32[8,512]{1,0:T(8,128)}', space=vmem, size = 0x4000, scoped, tag = 'scratch operand']
  %s0 = inlined_call_operand.vmem [shape: f32[2,3,8,256], index: 0, kind: input, shape index: {}]
  %s1 = inlined_call_operand.vmem [shape: f32[2,3,3,512], index: 1, kind: input, shape index: {}]
  %s2 = inlined_call_operand.vmem [shape: f32[2,1,512], index: 2, kind: input, shape index: {}]
  %s3 = inlined_call_operand.hbm [shape: f32[2,8,512], index: 3, kind: output, shape index: {}]
  %s4 = sld [smem:[#allocation0]]
  $region53: #{tpu_custom_call.1} parent=0
    _
  %s6 = ssub.s32 1, %s4
  %s7 = scalar_select 0, %s6, %s4
  $region1: #{tpu_custom_call.1} parent=0
    #allocation3 [shape = 'u8[32768]{0}', space=vmem, size = 0x8000, scoped, tag = 'output window, operand 0']
    #allocation4 [shape = 's32[2]{0}', space=sflag, size = 0x8, scoped, tag = 'scoped memory for tpu_custom_call.1']
    %8 = vsyncpa [#allocation4], 0
    %s9 = scalar_lea.sflag [#allocation4], 1
    %10 = vsyncpa %s9, 0
    loop: start=0, step=1, limit=8
    $region2: #{tpu_custom_call.1} parent=1 // loop_pre_header
      _
    $region3: #{tpu_custom_call.1} parent=1 // loop_header
      %s12 = sphi 0, %s16
      %p13 = scmp.ge.s32.totalorder %s12, 8
      %s19 = sphi 0, %s38
      %s20 = sphi 0, %s34
      %s21 = sphi 0, %s30
      %s22 = sphi 0, %s19
      %s23 = sphi 0, %s20
      %s24 = sphi 0, %s21
      %s25 = sphi 0, %s22
      %s26 = sphi 0, %s23
      %s27 = sphi 0, %s24
      %s43 = sphi 0, %s45
      %s46 = sphi 0, %s43
      %s47 = sphi 0, %s46
      %s63 = sphi 0, %s47
      %s73 = sphi 0, %s75
      %s76 = sphi 0, %s73
      %s77 = sphi 0, %s76
      %s93 = sphi 0, %s77
      %s101 = sphi 0, %s103
      %s104 = sphi 0, %s101
      %s105 = sphi 0, %s104
      %s121 = sphi 0, %s105
      %s129 = sphi 0, %s131
      %s132 = sphi 0, %s129
      %s133 = sphi 0, %s132
      %s149 = sphi 0, %s133
    $region4: #{tpu_custom_call.1} parent=1 // loop_header_branch
      %15 = sbr.rel (%p13) target = $region8
    $region5: #{tpu_custom_call.1} parent=1 // loop_body
      %s17 = ssub.s32 %s12, 1
      %s18 = ssub.s32 %s12, 2
      %s28 = sadd.s32 1, %s21
      %p29 = scmp.ge.s32.totalorder %s28, 3
      %s30 = scalar_select %p29, 0, %s28
      %s31 = sadd.s32 1, %s20
      %s32 = scalar_select %p29, %s31, %s20
      %p33 = scmp.ge.s32.totalorder %s32, 1
      %s34 = scalar_select %p33, 0, %s32
      %s35 = sadd.s32 1, %s19
      %s36 = scalar_select %p33, %s35, %s19
      %p37 = scmp.ge.s32.totalorder %s36, 2
      %s38 = scalar_select %p37, 0, %s36
      %s39 = ssub.s32 %s19, %s38
      %s40 = ssub.s32 %s21, %s30
      %s41 = sor.u32 %s39, %s40
      %p42 = scmp.eq.s32.totalorder %s41, 0
      %s44 = sadd.s32 %s43, 1
      %s45 = scalar_select %p42, %s43, %s44
      %p48 = pneg %p42
      %p49 = scmp.eq.s32.totalorder %s12, 5
      %p50 = por %p48, %p49
      %p51 = scmp.ne.s32.totalorder %s43, %s46
      %p52 = scmp.eq.s32.totalorder %s12, 0
      %p53 = por %p51, %p52
      %p54 = scmp.ne.s32.totalorder %s43, %s46
      %p55 = scmp.eq.s32.totalorder %s17, 5
      %p56 = por %p54, %p55
      %p57 = scmp.ne.s32.totalorder %s46, %s47
      %p58 = scmp.eq.s32.totalorder %s17, 0
      %p59 = por %p57, %p58
      %p60 = scmp.ne.s32.totalorder %s46, %s47
      %p61 = scmp.eq.s32.totalorder %s18, 5
      %p62 = por %p60, %p61
      %p64 = scmp.ne.s32.totalorder %s47, %s63
      %p65 = scmp.eq.s32.totalorder %s18, 0
      %p66 = por %p64, %p65
      %s67 = ssub.s32 %s19, %s38
      %s68 = ssub.s32 %s21, %s30
      %s69 = sor.u32 %s67, %s68
      %s70 = ssub.s32 %s20, %s34
      %s71 = sor.u32 %s69, %s70
      %p72 = scmp.eq.s32.totalorder %s71, 0
      %s74 = sadd.s32 %s73, 1
      %s75 = scalar_select %p72, %s73, %s74
      %p78 = pneg %p72
      %p79 = scmp.eq.s32.totalorder %s12, 5
      %p80 = por %p78, %p79
      %p81 = scmp.ne.s32.totalorder %s73, %s76
      %p82 = scmp.eq.s32.totalorder %s12, 0
      %p83 = por %p81, %p82
      %p84 = scmp.ne.s32.totalorder %s73, %s76
      %p85 = scmp.eq.s32.totalorder %s17, 5
      %p86 = por %p84, %p85
      %p87 = scmp.ne.s32.totalorder %s76, %s77
      %p88 = scmp.eq.s32.totalorder %s17, 0
      %p89 = por %p87, %p88
      %p90 = scmp.ne.s32.totalorder %s76, %s77
      %p91 = scmp.eq.s32.totalorder %s18, 5
      %p92 = por %p90, %p91
      %p94 = scmp.ne.s32.totalorder %s77, %s93
      %p95 = scmp.eq.s32.totalorder %s18, 0
      %p96 = por %p94, %p95
      %s97 = ssub.s32 %s19, %s38
      %s98 = ssub.s32 %s20, %s34
      %s99 = sor.u32 %s97, %s98
      %p100 = scmp.eq.s32.totalorder %s99, 0
      %s102 = sadd.s32 %s101, 1
      %s103 = scalar_select %p100, %s101, %s102
      %p106 = pneg %p100
      %p107 = scmp.eq.s32.totalorder %s12, 5
      %p108 = por %p106, %p107
      %p109 = scmp.ne.s32.totalorder %s101, %s104
      %p110 = scmp.eq.s32.totalorder %s12, 0
      %p111 = por %p109, %p110
      %p112 = scmp.ne.s32.totalorder %s101, %s104
      %p113 = scmp.eq.s32.totalorder %s17, 5
      %p114 = por %p112, %p113
      %p115 = scmp.ne.s32.totalorder %s104, %s105
      %p116 = scmp.eq.s32.totalorder %s17, 0
      %p117 = por %p115, %p116
      %p118 = scmp.ne.s32.totalorder %s104, %s105
      %p119 = scmp.eq.s32.totalorder %s18, 5
      %p120 = por %p118, %p119
      %p122 = scmp.ne.s32.totalorder %s105, %s121
      %p123 = scmp.eq.s32.totalorder %s18, 0
      %p124 = por %p122, %p123
      %s125 = ssub.s32 %s19, %s38
      %s126 = ssub.s32 %s20, %s34
      %s127 = sor.u32 %s125, %s126
      %p128 = scmp.eq.s32.totalorder %s127, 0
      %s130 = sadd.s32 %s129, 1
      %s131 = scalar_select %p128, %s129, %s130
      %p134 = pneg %p128
      %p135 = scmp.eq.s32.totalorder %s12, 5
      %p136 = por %p134, %p135
      %p137 = scmp.ne.s32.totalorder %s129, %s132
      %p138 = scmp.eq.s32.totalorder %s12, 0
      %p139 = por %p137, %p138
      %p140 = scmp.ne.s32.totalorder %s129, %s132
      %p141 = scmp.eq.s32.totalorder %s17, 5
      %p142 = por %p140, %p141
      %p143 = scmp.ne.s32.totalorder %s132, %s133
      %p144 = scmp.eq.s32.totalorder %s17, 0
      %p145 = por %p143, %p144
      %p146 = scmp.ne.s32.totalorder %s132, %s133
      %p147 = scmp.eq.s32.totalorder %s18, 5
      %p148 = por %p146, %p147
      %p150 = scmp.ne.s32.totalorder %s133, %s149
      %p151 = scmp.eq.s32.totalorder %s18, 0
      %p152 = por %p150, %p151
      %p153 = scmp.le.s32.totalorder 1, %s12
      %p154 = scmp.lt.s32.totalorder %s12, 7
      %p155 = pnand %p153, %p154
      %p156 = pneg %p155
      // Predicated region
      $region9: #{tpu_custom_call.1} parent=5 // pred_check
        _
      $region10: #{tpu_custom_call.1} parent=5 // pred_check_branch
        %158 = sbr.rel (%p155) target = $region12
      $region11: #{tpu_custom_call.1} parent=5 // pred_region
        %s159 = ssub.s32 %s12, 1
      $region12: #{tpu_custom_call.1} parent=5 // pred_fallthru
        _
      %p160 = scmp.lt.s32.totalorder %s12, 6
      // Predicated region
      $region13: #{tpu_custom_call.1} parent=5 // pred_check
        %p161 = pneg %p160
      $region14: #{tpu_custom_call.1} parent=5 // pred_check_branch
        %163 = sbr.rel (%p161) target = $region16
      $region15: #{tpu_custom_call.1} parent=5 // pred_region
        // Predicated region
        $region17: #{tpu_custom_call.1} parent=15 // pred_check
          %p164 = pneg %p53
        $region18: #{tpu_custom_call.1} parent=15 // pred_check_branch
          %166 = sbr.rel (%p164) target = $region20
        $region19: #{tpu_custom_call.1} parent=15 // pred_region
          %p167 = scmp.lt.s32.totalorder %s19, 1
          %s168 = scalar_select %p167, %s19, 1
          %p169 = scmp.lt.s32.totalorder %s21, 2
          %s170 = scalar_select %p169, %s21, 2
          %s171 = smul.addr %s170, 2
          %s172 = smul.addr %s168, 6
          %s173 = sadd.s32 %s171, %s172
          %s174 = smul.addr %s173, 8
          %s175 = scalar_lea.vmem %s0, %s174
        $region20: #{tpu_custom_call.1} parent=15 // pred_fallthru
          _
        // Predicated region
        $region21: #{tpu_custom_call.1} parent=15 // pred_check
          %p176 = pneg %p83
        $region22: #{tpu_custom_call.1} parent=15 // pred_check_branch
          %178 = sbr.rel (%p176) target = $region24
        $region23: #{tpu_custom_call.1} parent=15 // pred_region
          %s179 = smul.u32 4, %s20
          %p180 = scmp.lt.s32.totalorder %s19, 1
          %s181 = scalar_select %p180, %s19, 1
          %p182 = scmp.lt.s32.totalorder %s21, 2
          %s183 = scalar_select %p182, %s21, 2
          %p184 = scmp.lt.s32.totalorder %s179, 3
          %s185 = scalar_select %p184, %s179, 3
          %s186 = smul.addr %s183, 4
          %s187 = sadd.s32 %s185, %s186
          %s188 = smul.addr %s181, 12
          %s189 = sadd.s32 %s187, %s188
          %s190 = smul.addr %s189, 4
          %s191 = scalar_lea.vmem %s1, %s190
          %s192 = smul.u32 4, %s20
        $region24: #{tpu_custom_call.1} parent=15 // pred_fallthru
          _
        // Predicated region
        $region25: #{tpu_custom_call.1} parent=15 // pred_check
          %p193 = pneg %p111
        $region26: #{tpu_custom_call.1} parent=15 // pred_check_branch
          %195 = sbr.rel (%p193) target = $region28
        $region27: #{tpu_custom_call.1} parent=15 // pred_region
          %s196 = smul.u32 4, %s20
          %p197 = scmp.lt.s32.totalorder %s19, 1
          %s198 = scalar_select %p197, %s19, 1
          %p199 = scmp.lt.s32.totalorder %s196, 3
          %s200 = scalar_select %p199, %s196, 3
          %s201 = smul.addr %s198, 4
          %s202 = sadd.s32 %s200, %s201
          %s203 = scalar_lea.vmem %s2, %s202
          %s204 = smul.u32 4, %s20
        $region28: #{tpu_custom_call.1} parent=15 // pred_fallthru
          _
      $region16: #{tpu_custom_call.1} parent=5 // pred_fallthru
        _
      %p205 = scmp.le.s32.totalorder 1, %s12
      %p206 = scmp.lt.s32.totalorder %s12, 7
      %p207 = pnand %p205, %p206
      %p208 = pneg %p207
      // Predicated region
      $region29: #{tpu_custom_call.1} parent=5 // pred_check
        _
      $region30: #{tpu_custom_call.1} parent=5 // pred_check_branch
        %210 = sbr.rel (%p207) target = $region32
      $region31: #{tpu_custom_call.1} parent=5 // pred_region
        %s211 = ssub.s32 %s12, 1
        %p212 = scmp.lt.s32.totalorder %s22, 1
        %s213 = scalar_select %p212, %s22, 1
        %p214 = scmp.lt.s32.totalorder %s24, 2
        %s215 = scalar_select %p214, %s24, 2
        %s216 = smul.addr %s215, 2
        %s217 = smul.addr %s213, 6
        %s218 = sadd.s32 %s216, %s217
        %s219 = smul.addr %s218, 8
        %s220 = scalar_lea.vmem %s0, %s219
        %p221 = pneg %p59
        %p222 = pneg %p56
        %s223 = smul.u32 4, %s23
        %p224 = scmp.lt.s32.totalorder %s22, 1
        %s225 = scalar_select %p224, %s22, 1
        %p226 = scmp.lt.s32.totalorder %s24, 2
        %s227 = scalar_select %p226, %s24, 2
        %p228 = scmp.lt.s32.totalorder %s223, 3
        %s229 = scalar_select %p228, %s223, 3
        %s230 = smul.addr %s227, 4
        %s231 = sadd.s32 %s229, %s230
        %s232 = smul.addr %s225, 12
        %s233 = sadd.s32 %s231, %s232
        %s234 = smul.addr %s233, 4
        %s235 = scalar_lea.vmem %s1, %s234
        %p236 = pneg %p89
        %p237 = pneg %p86
        %s238 = smul.u32 4, %s23
        %p239 = scmp.lt.s32.totalorder %s22, 1
        %s240 = scalar_select %p239, %s22, 1
        %p241 = scmp.lt.s32.totalorder %s238, 3
        %s242 = scalar_select %p241, %s238, 3
        %s243 = smul.addr %s240, 4
        %s244 = sadd.s32 %s242, %s243
        %s245 = scalar_lea.vmem %s2, %s244
        %p246 = pneg %p117
        %p247 = pneg %p114
        %p248 = pneg %p145
        %p249 = pneg %p142
        %s250 = sand.u32 %s132, 1
        %s251 = scalar_lea.sflag [#allocation4], %s250
        %s252 = sand.u32 %s132, 1
        %s253 = smul.addr %s252, 32
        %s254 = scalar_lea.vmem [#allocation3], %s253
        %p255 = scmp.lt.s32.totalorder %s22, 1
        %s256 = scalar_select %p255, %s22, 1
        %p257 = scmp.lt.s32.totalorder %s24, 2
        %s258 = scalar_select %p257, %s24, 2
        %s259 = smul.addr %s258, 2
        %s260 = smul.addr %s256, 6
        %s261 = sadd.s32 %s259, %s260
        %s262 = smul.addr %s261, 8
        %s263 = scalar_lea.vmem %s0, %s262
        %s264 = smul.u32 4, %s23
        %p265 = scmp.lt.s32.totalorder %s22, 1
        %s266 = scalar_select %p265, %s22, 1
        %p267 = scmp.lt.s32.totalorder %s24, 2
        %s268 = scalar_select %p267, %s24, 2
        %p269 = scmp.lt.s32.totalorder %s264, 3
        %s270 = scalar_select %p269, %s264, 3
        %s271 = smul.addr %s268, 4
        %s272 = sadd.s32 %s270, %s271
        %s273 = smul.addr %s266, 12
        %s274 = sadd.s32 %s272, %s273
        %s275 = smul.addr %s274, 4
        %s276 = scalar_lea.vmem %s1, %s275
        %s277 = smul.u32 4, %s23
        %s278 = smul.u32 4, %s23
        %p279 = scmp.lt.s32.totalorder %s22, 1
        %s280 = scalar_select %p279, %s22, 1
        %p281 = scmp.lt.s32.totalorder %s278, 3
        %s282 = scalar_select %p281, %s278, 3
        %s283 = smul.addr %s280, 4
        %s284 = sadd.s32 %s282, %s283
        %s285 = scalar_lea.vmem %s2, %s284
        %s286 = smul.u32 4, %s23
        %s287 = smul.u32 4, %s23
        %p288 = scmp.eq.s32.totalorder %s24, 0
        // Predicated region
        $region33: #{tpu_custom_call.1} parent=31 // pred_check
          %p289 = pneg %p288
        $region34: #{tpu_custom_call.1} parent=31 // pred_check_branch
          %291 = sbr.rel (%p289) target = $region36
        $region35: #{tpu_custom_call.1} parent=31 // pred_region
          %292 = vst [vmem:[#allocation2] sm:$0xff] 0.0
          %293 = vst [vmem:[#allocation2 + $0x8] sm:$0xff] 0.0
          %294 = vst [vmem:[#allocation2 + $0x10] sm:$0xff] 0.0
          %295 = vst [vmem:[#allocation2 + $0x18] sm:$0xff] 0.0
        $region36: #{tpu_custom_call.1} parent=31 // pred_fallthru
          _
        %v296 = vld [vmem:[%s263] sm:$0xff]
        %v297 = vld [vmem:[%s263 + $0x8] sm:$0xff]
        %v298 = vld [vmem:[%s276] sm:$0x77]
        %v299 = vld [vmem:[%s276 + $0x8] sm:$0x77]
        %v300 = vlaneseq
        %v301 = vshrl.u32 %v300, 7
        %v302 = vadd.s32 %v301, 8
        %v303 = vcvt.s32.f32 %v301
        %v304 = vcvt.s32.f32 %v302
        %v307 = vperm.slane %v298, 1
        %v308 = vperm.slane %v298, 5
        %v309 = vperm.slane %v299, 1
        %v310 = vperm.slane %v299, 5
        %v315 = vperm.slane %v307, 1
        %v316 = vperm.slane %v308, 1
        %v317 = vperm.slane %v309, 1
        %v318 = vperm.slane %v310, 1
        %v319 = vsub.f32 %v315, %v303
        %v320 = vsub.f32 %v316, %v303
        %v321 = vsub.f32 %v317, %v303
        %v322 = vsub.f32 %v318, %v303
        %v323 = vsub.f32 %v315, %v304
        %v324 = vsub.f32 %v316, %v304
        %v325 = vsub.f32 %v317, %v304
        %v326 = vsub.f32 %v318, %v304
        %v327 = vand.u32 2147483647, %v319
        %v328 = vand.u32 2147483647, %v320
        %v329 = vand.u32 2147483647, %v321
        %v330 = vand.u32 2147483647, %v322
        %v331 = vand.u32 2147483647, %v323
        %v332 = vand.u32 2147483647, %v324
        %v333 = vand.u32 2147483647, %v325
        %v334 = vand.u32 2147483647, %v326
        %v335 = vsub.f32 1.0, %v327
        %v336 = vsub.f32 1.0, %v328
        %v337 = vsub.f32 1.0, %v329
        %v338 = vsub.f32 1.0, %v330
        %v339 = vsub.f32 1.0, %v331
        %v340 = vsub.f32 1.0, %v332
        %v341 = vsub.f32 1.0, %v333
        %v342 = vsub.f32 1.0, %v334
        %v343 = vmax.f32 %v335, 0.0
        %v344 = vmax.f32 %v336, 0.0
        %v345 = vmax.f32 %v337, 0.0
        %v346 = vmax.f32 %v338, 0.0
        %v347 = vmax.f32 %v339, 0.0
        %v348 = vmax.f32 %v340, 0.0
        %v349 = vmax.f32 %v341, 0.0
        %v350 = vmax.f32 %v342, 0.0
        %v351 = vperm.slane %v298, 0
        %v352 = vperm.slane %v298, 4
        %v353 = vperm.slane %v299, 0
        %v354 = vperm.slane %v299, 4
        %v359 = vperm.slane %v351, 0
        %v360 = vperm.slane %v352, 0
        %v361 = vperm.slane %v353, 0
        %v362 = vperm.slane %v354, 0
        %v363 = vsub.f32 %v359, %v303
        %v364 = vsub.f32 %v360, %v303
        %v365 = vsub.f32 %v361, %v303
        %v366 = vsub.f32 %v362, %v303
        %v367 = vsub.f32 %v359, %v304
        %v368 = vsub.f32 %v360, %v304
        %v369 = vsub.f32 %v361, %v304
        %v370 = vsub.f32 %v362, %v304
        %v371 = vand.u32 2147483647, %v363
        %v372 = vand.u32 2147483647, %v364
        %v373 = vand.u32 2147483647, %v365
        %v374 = vand.u32 2147483647, %v366
        %v375 = vand.u32 2147483647, %v367
        %v376 = vand.u32 2147483647, %v368
        %v377 = vand.u32 2147483647, %v369
        %v378 = vand.u32 2147483647, %v370
        %v379 = vsub.f32 1.0, %v371
        %v380 = vsub.f32 1.0, %v372
        %v381 = vsub.f32 1.0, %v373
        %v382 = vsub.f32 1.0, %v374
        %v383 = vsub.f32 1.0, %v375
        %v384 = vsub.f32 1.0, %v376
        %v385 = vsub.f32 1.0, %v377
        %v386 = vsub.f32 1.0, %v378
        %v387 = vmax.f32 %v379, 0.0
        %v388 = vmax.f32 %v380, 0.0
        %v389 = vmax.f32 %v381, 0.0
        %v390 = vmax.f32 %v382, 0.0
        %v391 = vmax.f32 %v383, 0.0
        %v392 = vmax.f32 %v384, 0.0
        %v393 = vmax.f32 %v385, 0.0
        %v394 = vmax.f32 %v386, 0.0
        %v403 = vrot.slane %v344, 7
        %v404 = vrot.slane %v345, 6
        %v405 = vrot.slane %v346, 5
        %v406 = vrot.slane %v348, 7
        %v407 = vrot.slane %v349, 6
        %v408 = vrot.slane %v350, 5
        %vm409 = vcmask 1040384
        %v410 = vsel %vm409, %v343, %v403
        %vm411 = vcmask 1042434
        %v412 = vsel %vm411, %v404, %v405
        %vm413 = vcmask 1041408
        %v414 = vsel %vm413, %v410, %v412
        %vm415 = vcmask 1041409
        %v416 = vsel %vm415, %v343, %v403
        %vm417 = vcmask 1043459
        %v418 = vsel %vm417, %v404, %v405
        %vm419 = vcmask 1042433
        %v420 = vsel %vm419, %v416, %v418
        %v421 = vrot.slane %v420, 1
        %v422 = vsel %vm411, %v343, %v403
        %vm423 = vcmask 1044484
        %v424 = vsel %vm423, %v404, %v405
        %vm425 = vcmask 1043458
        %v426 = vsel %vm425, %v422, %v424
        %v427 = vrot.slane %v426, 2
        %v428 = vsel %vm417, %v343, %v403
        %vm429 = vcmask 1045509
        %v430 = vsel %vm429, %v404, %v405
        %vm431 = vcmask 1044483
        %v432 = vsel %vm431, %v428, %v430
        %v433 = vrot.slane %v432, 3
        %v434 = vsel %vm423, %v343, %v403
        %vm435 = vcmask 1046534
        %v436 = vsel %vm435, %v404, %v405
        %vm437 = vcmask 1045508
        %v438 = vsel %vm437, %v434, %v436
        %v439 = vrot.slane %v438, 4
        %v440 = vsel %vm429, %v343, %v403
        %vm441 = vcmask 1046528
        %v442 = vsel %vm441, %v405, %v404
        %vm443 = vcmask 1046533
        %v444 = vsel %vm443, %v440, %v442
        %v445 = vrot.slane %v444, 5
        %v446 = vsel %vm435, %v343, %v403
        %v447 = vsel %vm409, %v404, %v405
        %vm448 = vcmask 1045504
        %v449 = vsel %vm448, %v447, %v446
        %v450 = vrot.slane %v449, 6
        %v451 = vsel %vm441, %v403, %v343
        %v452 = vsel %vm415, %v404, %v405
        %vm453 = vcmask 1046529
        %v454 = vsel %vm453, %v452, %v451
        %v455 = vrot.slane %v454, 7
        %v456 = vsel %vm409, %v347, %v406
        %v457 = vsel %vm411, %v407, %v408
        %v458 = vsel %vm413, %v456, %v457
        %v459 = vsel %vm415, %v347, %v406
        %v460 = vsel %vm417, %v407, %v408
        %v461 = vsel %vm419, %v459, %v460
        %v462 = vrot.slane %v461, 1
        %v463 = vsel %vm411, %v347, %v406
        %v464 = vsel %vm423, %v407, %v408
        %v465 = vsel %vm425, %v463, %v464
        %v466 = vrot.slane %v465, 2
        %v467 = vsel %vm417, %v347, %v406
        %v468 = vsel %vm429, %v407, %v408
        %v469 = vsel %vm431, %v467, %v468
        %v470 = vrot.slane %v469, 3
        %v471 = vsel %vm423, %v347, %v406
        %v472 = vsel %vm435, %v407, %v408
        %v473 = vsel %vm437, %v471, %v472
        %v474 = vrot.slane %v473, 4
        %v475 = vsel %vm429, %v347, %v406
        %v476 = vsel %vm441, %v408, %v407
        %v477 = vsel %vm443, %v475, %v476
        %v478 = vrot.slane %v477, 5
        %v479 = vsel %vm435, %v347, %v406
        %v480 = vsel %vm409, %v407, %v408
        %v481 = vsel %vm448, %v480, %v479
        %v482 = vrot.slane %v481, 6
        %v483 = vsel %vm441, %v406, %v347
        %v484 = vsel %vm415, %v407, %v408
        %v485 = vsel %vm453, %v484, %v483
        %v486 = vrot.slane %v485, 7
        %v487 = vperm.slane %v414, 0
        %v488 = vperm.slane %v414, 1
        %v489 = vperm.slane %v414, 2
        %v490 = vperm.slane %v414, 3
        %v491 = vperm.slane %v421, 0
        %v492 = vperm.slane %v421, 1
        %v493 = vperm.slane %v421, 2
        %v494 = vperm.slane %v421, 3
        %v495 = vperm.slane %v427, 0
        %v496 = vperm.slane %v427, 1
        %v497 = vperm.slane %v427, 2
        %v498 = vperm.slane %v427, 3
        %v499 = vperm.slane %v433, 0
        %v500 = vperm.slane %v433, 1
        %v501 = vperm.slane %v433, 2
        %v502 = vperm.slane %v433, 3
        %v503 = vperm.slane %v439, 0
        %v504 = vperm.slane %v439, 1
        %v505 = vperm.slane %v439, 2
        %v506 = vperm.slane %v439, 3
        %v507 = vperm.slane %v445, 0
        %v508 = vperm.slane %v445, 1
        %v509 = vperm.slane %v445, 2
        %v510 = vperm.slane %v445, 3
        %v511 = vperm.slane %v450, 0
        %v512 = vperm.slane %v450, 1
        %v513 = vperm.slane %v450, 2
        %v514 = vperm.slane %v450, 3
        %v515 = vperm.slane %v455, 0
        %v516 = vperm.slane %v455, 1
        %v517 = vperm.slane %v455, 2
        %v518 = vperm.slane %v455, 3
        %v519 = vperm.slane %v458, 0
        %v520 = vperm.slane %v458, 1
        %v521 = vperm.slane %v458, 2
        %v522 = vperm.slane %v458, 3
        %v523 = vperm.slane %v462, 0
        %v524 = vperm.slane %v462, 1
        %v525 = vperm.slane %v462, 2
        %v526 = vperm.slane %v462, 3
        %v527 = vperm.slane %v466, 0
        %v528 = vperm.slane %v466, 1
        %v529 = vperm.slane %v466, 2
        %v530 = vperm.slane %v466, 3
        %v531 = vperm.slane %v470, 0
        %v532 = vperm.slane %v470, 1
        %v533 = vperm.slane %v470, 2
        %v534 = vperm.slane %v470, 3
        %v535 = vperm.slane %v474, 0
        %v536 = vperm.slane %v474, 1
        %v537 = vperm.slane %v474, 2
        %v538 = vperm.slane %v474, 3
        %v539 = vperm.slane %v478, 0
        %v540 = vperm.slane %v478, 1
        %v541 = vperm.slane %v478, 2
        %v542 = vperm.slane %v478, 3
        %v543 = vperm.slane %v482, 0
        %v544 = vperm.slane %v482, 1
        %v545 = vperm.slane %v482, 2
        %v546 = vperm.slane %v482, 3
        %v547 = vperm.slane %v486, 0
        %v548 = vperm.slane %v486, 1
        %v549 = vperm.slane %v486, 2
        %v550 = vperm.slane %v486, 3
        %v615 = vmul.f32 %v487, %v387
        %v616 = vmul.f32 %v488, %v388
        %v617 = vmul.f32 %v489, %v389
        %v618 = vmul.f32 %v490, %v390
        %v619 = vmul.f32 %v487, %v391
        %v620 = vmul.f32 %v488, %v392
        %v621 = vmul.f32 %v489, %v393
        %v622 = vmul.f32 %v490, %v394
        %v623 = vmul.f32 %v491, %v387
        %v624 = vmul.f32 %v492, %v388
        %v625 = vmul.f32 %v493, %v389
        %v626 = vmul.f32 %v494, %v390
        %v627 = vmul.f32 %v491, %v391
        %v628 = vmul.f32 %v492, %v392
        %v629 = vmul.f32 %v493, %v393
        %v630 = vmul.f32 %v494, %v394
        %v631 = vmul.f32 %v495, %v387
        %v632 = vmul.f32 %v496, %v388
        %v633 = vmul.f32 %v497, %v389
        %v634 = vmul.f32 %v498, %v390
        %v635 = vmul.f32 %v495, %v391
        %v636 = vmul.f32 %v496, %v392
        %v637 = vmul.f32 %v497, %v393
        %v638 = vmul.f32 %v498, %v394
        %v639 = vmul.f32 %v499, %v387
        %v640 = vmul.f32 %v500, %v388
        %v641 = vmul.f32 %v501, %v389
        %v642 = vmul.f32 %v502, %v390
        %v643 = vmul.f32 %v499, %v391
        %v644 = vmul.f32 %v500, %v392
        %v645 = vmul.f32 %v501, %v393
        %v646 = vmul.f32 %v502, %v394
        %v647 = vmul.f32 %v503, %v387
        %v648 = vmul.f32 %v504, %v388
        %v649 = vmul.f32 %v505, %v389
        %v650 = vmul.f32 %v506, %v390
        %v651 = vmul.f32 %v503, %v391
        %v652 = vmul.f32 %v504, %v392
        %v653 = vmul.f32 %v505, %v393
        %v654 = vmul.f32 %v506, %v394
        %v655 = vmul.f32 %v507, %v387
        %v656 = vmul.f32 %v508, %v388
        %v657 = vmul.f32 %v509, %v389
        %v658 = vmul.f32 %v510, %v390
        %v659 = vmul.f32 %v507, %v391
        %v660 = vmul.f32 %v508, %v392
        %v661 = vmul.f32 %v509, %v393
        %v662 = vmul.f32 %v510, %v394
        %v663 = vmul.f32 %v511, %v387
        %v664 = vmul.f32 %v512, %v388
        %v665 = vmul.f32 %v513, %v389
        %v666 = vmul.f32 %v514, %v390
        %v667 = vmul.f32 %v511, %v391
        %v668 = vmul.f32 %v512, %v392
        %v669 = vmul.f32 %v513, %v393
        %v670 = vmul.f32 %v514, %v394
        %v671 = vmul.f32 %v515, %v387
        %v672 = vmul.f32 %v516, %v388
        %v673 = vmul.f32 %v517, %v389
        %v674 = vmul.f32 %v518, %v390
        %v675 = vmul.f32 %v515, %v391
        %v676 = vmul.f32 %v516, %v392
        %v677 = vmul.f32 %v517, %v393
        %v678 = vmul.f32 %v518, %v394
        %v679 = vmul.f32 %v519, %v387
        %v680 = vmul.f32 %v520, %v388
        %v681 = vmul.f32 %v521, %v389
        %v682 = vmul.f32 %v522, %v390
        %v683 = vmul.f32 %v519, %v391
        %v684 = vmul.f32 %v520, %v392
        %v685 = vmul.f32 %v521, %v393
        %v686 = vmul.f32 %v522, %v394
        %v687 = vmul.f32 %v523, %v387
        %v688 = vmul.f32 %v524, %v388
        %v689 = vmul.f32 %v525, %v389
        %v690 = vmul.f32 %v526, %v390
        %v691 = vmul.f32 %v523, %v391
        %v692 = vmul.f32 %v524, %v392
        %v693 = vmul.f32 %v525, %v393
        %v694 = vmul.f32 %v526, %v394
        %v695 = vmul.f32 %v527, %v387
        %v696 = vmul.f32 %v528, %v388
        %v697 = vmul.f32 %v529, %v389
        %v698 = vmul.f32 %v530, %v390
        %v699 = vmul.f32 %v527, %v391
        %v700 = vmul.f32 %v528, %v392
        %v701 = vmul.f32 %v529, %v393
        %v702 = vmul.f32 %v530, %v394
        %v703 = vmul.f32 %v531, %v387
        %v704 = vmul.f32 %v532, %v388
        %v705 = vmul.f32 %v533, %v389
        %v706 = vmul.f32 %v534, %v390
        %v707 = vmul.f32 %v531, %v391
        %v708 = vmul.f32 %v532, %v392
        %v709 = vmul.f32 %v533, %v393
        %v710 = vmul.f32 %v534, %v394
        %v711 = vmul.f32 %v535, %v387
        %v712 = vmul.f32 %v536, %v388
        %v713 = vmul.f32 %v537, %v389
        %v714 = vmul.f32 %v538, %v390
        %v715 = vmul.f32 %v535, %v391
        %v716 = vmul.f32 %v536, %v392
        %v717 = vmul.f32 %v537, %v393
        %v718 = vmul.f32 %v538, %v394
        %v719 = vmul.f32 %v539, %v387
        %v720 = vmul.f32 %v540, %v388
        %v721 = vmul.f32 %v541, %v389
        %v722 = vmul.f32 %v542, %v390
        %v723 = vmul.f32 %v539, %v391
        %v724 = vmul.f32 %v540, %v392
        %v725 = vmul.f32 %v541, %v393
        %v726 = vmul.f32 %v542, %v394
        %v727 = vmul.f32 %v543, %v387
        %v728 = vmul.f32 %v544, %v388
        %v729 = vmul.f32 %v545, %v389
        %v730 = vmul.f32 %v546, %v390
        %v731 = vmul.f32 %v543, %v391
        %v732 = vmul.f32 %v544, %v392
        %v733 = vmul.f32 %v545, %v393
        %v734 = vmul.f32 %v546, %v394
        %v735 = vmul.f32 %v547, %v387
        %v736 = vmul.f32 %v548, %v388
        %v737 = vmul.f32 %v549, %v389
        %v738 = vmul.f32 %v550, %v390
        %v739 = vmul.f32 %v547, %v391
        %v740 = vmul.f32 %v548, %v392
        %v741 = vmul.f32 %v549, %v393
        %v742 = vmul.f32 %v550, %v394
        %743 = vmatpush.msra.mxu0 %v675
        %744 = vmatpush.msra.mxu0 %v671
        %745 = vmatpush.msra.mxu0 %v667
        %746 = vmatpush.msra.mxu0 %v663
        %747 = vmatpush.msra.mxu0 %v659
        %748 = vmatpush.msra.mxu0 %v655
        %749 = vmatpush.msra.mxu0 %v651
        %750 = vmatpush.msra.mxu0 %v647
        %751 = vmatpush.msra.mxu0 %v643
        %752 = vmatpush.msra.mxu0 %v639
        %753 = vmatpush.msra.mxu0 %v635
        %754 = vmatpush.msra.mxu0 %v631
        %755 = vmatpush.msra.mxu0 %v627
        %756 = vmatpush.msra.mxu0 %v623
        %757 = vmatpush.msra.mxu0 %v619
        %758 = vmatpush.msra.mxu0 %v615
        %759 = vmatmul.f32.gmra.mxu0 %v296
        %v760 = vpop.f32.mrf.mxu0
        %v761 = vadd.f32 0.0, %v760
        %762 = vdwg.mxu0
        %763 = vmatpush.msra.mxu0 %v739
        %764 = vmatpush.msra.mxu0 %v735
        %765 = vmatpush.msra.mxu0 %v731
        %766 = vmatpush.msra.mxu0 %v727
        %767 = vmatpush.msra.mxu0 %v723
        %768 = vmatpush.msra.mxu0 %v719
        %769 = vmatpush.msra.mxu0 %v715
        %770 = vmatpush.msra.mxu0 %v711
        %771 = vmatpush.msra.mxu0 %v707
        %772 = vmatpush.msra.mxu0 %v703
        %773 = vmatpush.msra.mxu0 %v699
        %774 = vmatpush.msra.mxu0 %v695
        %775 = vmatpush.msra.mxu0 %v691
        %776 = vmatpush.msra.mxu0 %v687
        %777 = vmatpush.msra.mxu0 %v683
        %778 = vmatpush.msra.mxu0 %v679
        %779 = vmatmul.f32.gmra.mxu0 %v297
        %v780 = vpop.f32.mrf.mxu0
        %v781 = vadd.f32 %v761, %v780
        %782 = vdwg.mxu0
        %783 = vmatpush.msra.mxu0 %v676
        %784 = vmatpush.msra.mxu0 %v672
        %785 = vmatpush.msra.mxu0 %v668
        %786 = vmatpush.msra.mxu0 %v664
        %787 = vmatpush.msra.mxu0 %v660
        %788 = vmatpush.msra.mxu0 %v656
        %789 = vmatpush.msra.mxu0 %v652
        %790 = vmatpush.msra.mxu0 %v648
        %791 = vmatpush.msra.mxu0 %v644
        %792 = vmatpush.msra.mxu0 %v640
        %793 = vmatpush.msra.mxu0 %v636
        %794 = vmatpush.msra.mxu0 %v632
        %795 = vmatpush.msra.mxu0 %v628
        %796 = vmatpush.msra.mxu0 %v624
        %797 = vmatpush.msra.mxu0 %v620
        %798 = vmatpush.msra.mxu0 %v616
        %799 = vmatmul.f32.gmra.mxu0 %v296
        %v800 = vpop.f32.mrf.mxu0
        %v801 = vadd.f32 0.0, %v800
        %802 = vdwg.mxu0
        %803 = vmatpush.msra.mxu0 %v740
        %804 = vmatpush.msra.mxu0 %v736
        %805 = vmatpush.msra.mxu0 %v732
        %806 = vmatpush.msra.mxu0 %v728
        %807 = vmatpush.msra.mxu0 %v724
        %808 = vmatpush.msra.mxu0 %v720
        %809 = vmatpush.msra.mxu0 %v716
        %810 = vmatpush.msra.mxu0 %v712
        %811 = vmatpush.msra.mxu0 %v708
        %812 = vmatpush.msra.mxu0 %v704
        %813 = vmatpush.msra.mxu0 %v700
        %814 = vmatpush.msra.mxu0 %v696
        %815 = vmatpush.msra.mxu0 %v692
        %816 = vmatpush.msra.mxu0 %v688
        %817 = vmatpush.msra.mxu0 %v684
        %818 = vmatpush.msra.mxu0 %v680
        %819 = vmatmul.f32.gmra.mxu0 %v297
        %v820 = vpop.f32.mrf.mxu0
        %v821 = vadd.f32 %v801, %v820
        %822 = vdwg.mxu0
        %823 = vmatpush.msra.mxu0 %v677
        %824 = vmatpush.msra.mxu0 %v673
        %825 = vmatpush.msra.mxu0 %v669
        %826 = vmatpush.msra.mxu0 %v665
        %827 = vmatpush.msra.mxu0 %v661
        %828 = vmatpush.msra.mxu0 %v657
        %829 = vmatpush.msra.mxu0 %v653
        %830 = vmatpush.msra.mxu0 %v649
        %831 = vmatpush.msra.mxu0 %v645
        %832 = vmatpush.msra.mxu0 %v641
        %833 = vmatpush.msra.mxu0 %v637
        %834 = vmatpush.msra.mxu0 %v633
        %835 = vmatpush.msra.mxu0 %v629
        %836 = vmatpush.msra.mxu0 %v625
        %837 = vmatpush.msra.mxu0 %v621
        %838 = vmatpush.msra.mxu0 %v617
        %839 = vmatmul.f32.gmra.mxu0 %v296
        %v840 = vpop.f32.mrf.mxu0
        %v841 = vadd.f32 0.0, %v840
        %842 = vdwg.mxu0
        %843 = vmatpush.msra.mxu0 %v741
        %844 = vmatpush.msra.mxu0 %v737
        %845 = vmatpush.msra.mxu0 %v733
        %846 = vmatpush.msra.mxu0 %v729
        %847 = vmatpush.msra.mxu0 %v725
        %848 = vmatpush.msra.mxu0 %v721
        %849 = vmatpush.msra.mxu0 %v717
        %850 = vmatpush.msra.mxu0 %v713
        %851 = vmatpush.msra.mxu0 %v709
        %852 = vmatpush.msra.mxu0 %v705
        %853 = vmatpush.msra.mxu0 %v701
        %854 = vmatpush.msra.mxu0 %v697
        %855 = vmatpush.msra.mxu0 %v693
        %856 = vmatpush.msra.mxu0 %v689
        %857 = vmatpush.msra.mxu0 %v685
        %858 = vmatpush.msra.mxu0 %v681
        %859 = vmatmul.f32.gmra.mxu0 %v297
        %v860 = vpop.f32.mrf.mxu0
        %v861 = vadd.f32 %v841, %v860
        %862 = vdwg.mxu0
        %863 = vmatpush.msra.mxu0 %v678
        %864 = vmatpush.msra.mxu0 %v674
        %865 = vmatpush.msra.mxu0 %v670
        %866 = vmatpush.msra.mxu0 %v666
        %867 = vmatpush.msra.mxu0 %v662
        %868 = vmatpush.msra.mxu0 %v658
        %869 = vmatpush.msra.mxu0 %v654
        %870 = vmatpush.msra.mxu0 %v650
        %871 = vmatpush.msra.mxu0 %v646
        %872 = vmatpush.msra.mxu0 %v642
        %873 = vmatpush.msra.mxu0 %v638
        %874 = vmatpush.msra.mxu0 %v634
        %875 = vmatpush.msra.mxu0 %v630
        %876 = vmatpush.msra.mxu0 %v626
        %877 = vmatpush.msra.mxu0 %v622
        %878 = vmatpush.msra.mxu0 %v618
        %879 = vmatmul.f32.gmra.mxu0 %v296
        %v880 = vpop.f32.mrf.mxu0
        %v881 = vadd.f32 0.0, %v880
        %882 = vdwg.mxu0
        %883 = vmatpush.msra.mxu0 %v742
        %884 = vmatpush.msra.mxu0 %v738
        %885 = vmatpush.msra.mxu0 %v734
        %886 = vmatpush.msra.mxu0 %v730
        %887 = vmatpush.msra.mxu0 %v726
        %888 = vmatpush.msra.mxu0 %v722
        %889 = vmatpush.msra.mxu0 %v718
        %890 = vmatpush.msra.mxu0 %v714
        %891 = vmatpush.msra.mxu0 %v710
        %892 = vmatpush.msra.mxu0 %v706
        %893 = vmatpush.msra.mxu0 %v702
        %894 = vmatpush.msra.mxu0 %v698
        %895 = vmatpush.msra.mxu0 %v694
        %896 = vmatpush.msra.mxu0 %v690
        %897 = vmatpush.msra.mxu0 %v686
        %898 = vmatpush.msra.mxu0 %v682
        %899 = vmatmul.f32.gmra.mxu0 %v297
        %v900 = vpop.f32.mrf.mxu0
        %v901 = vadd.f32 %v881, %v900
        %902 = vdwg.mxu0
        %v903 = vld [vmem:[#allocation2] sm:$0xff]
        %v904 = vld [vmem:[#allocation2 + $0x8] sm:$0xff]
        %v905 = vld [vmem:[#allocation2 + $0x10] sm:$0xff]
        %v906 = vld [vmem:[#allocation2 + $0x18] sm:$0xff]
        %v907 = vperm.slane %v298, 2
        %v908 = vperm.slane %v298, 6
        %v909 = vperm.slane %v299, 2
        %v910 = vperm.slane %v299, 6
        %v915 = vperm.slane %v907, 2
        %v916 = vperm.slane %v908, 2
        %v917 = vperm.slane %v909, 2
        %v918 = vperm.slane %v910, 2
        %v919 = vmul.f32 %v781, %v915
        %v920 = vmul.f32 %v821, %v916
        %v921 = vmul.f32 %v861, %v917
        %v922 = vmul.f32 %v901, %v918
        %v923 = vadd.f32 %v903, %v919
        %v924 = vadd.f32 %v904, %v920
        %v925 = vadd.f32 %v905, %v921
        %v926 = vadd.f32 %v906, %v922
        %927 = vst [vmem:[#allocation2] sm:$0xff] %v923
        %928 = vst [vmem:[#allocation2 + $0x8] sm:$0xff] %v924
        %929 = vst [vmem:[#allocation2 + $0x10] sm:$0xff] %v925
        %930 = vst [vmem:[#allocation2 + $0x18] sm:$0xff] %v926
        %p931 = scmp.eq.s32.totalorder %s24, 2
        // Predicated region
        $region37: #{tpu_custom_call.1} parent=31 // pred_check
          %p932 = pneg %p931
        $region38: #{tpu_custom_call.1} parent=31 // pred_check_branch
          %934 = sbr.rel (%p932) target = $region40
        $region39: #{tpu_custom_call.1} parent=31 // pred_region
          %v935 = vld [vmem:[%s285] sm:$0xf]
          %v936 = vadd.f32 %v935, 1e-06
          %v937 = vrcp.pop %v936
          %v938 = vld [vmem:[#allocation2] sm:$0xff]
          %v939 = vld [vmem:[#allocation2 + $0x8] sm:$0xff]
          %v940 = vld [vmem:[#allocation2 + $0x10] sm:$0xff]
          %v941 = vld [vmem:[#allocation2 + $0x18] sm:$0xff]
          %v943 = vperm.slane %v937, 0
          %v944 = vperm.slane %v937, 1
          %v945 = vperm.slane %v937, 2
          %v946 = vperm.slane %v937, 3
          %v951 = vmul.f32 %v938, %v943
          %v952 = vmul.f32 %v939, %v944
          %v953 = vmul.f32 %v940, %v945
          %v954 = vmul.f32 %v941, %v946
          %v955 = vmax.f32 %v951, 0.0
          %v956 = vmax.f32 %v952, 0.0
          %v957 = vmax.f32 %v953, 0.0
          %v958 = vmax.f32 %v954, 0.0
          %v959 = vmin.f32 %v955, 1.0
          %v960 = vmin.f32 %v956, 1.0
          %v961 = vmin.f32 %v957, 1.0
          %v962 = vmin.f32 %v958, 1.0
          %963 = vst [vmem:[%s254] sm:$0xff] %v959
          %964 = vst [vmem:[%s254 + $0x8] sm:$0xff] %v960
          %965 = vst [vmem:[%s254 + $0x10] sm:$0xff] %v961
          %966 = vst [vmem:[%s254 + $0x18] sm:$0xff] %v962
        $region40: #{tpu_custom_call.1} parent=31 // pred_fallthru
          _
        %s967 = sand.u32 %s132, 1
        %s968 = scalar_lea.sflag [#allocation4], %s967
        %s969 = sand.u32 %s132, 1
        %s970 = smul.addr %s969, 32
        %s971 = scalar_lea.vmem [#allocation3], %s970
        // Predicated region
        $region41: #{tpu_custom_call.1} parent=31 // pred_check
          %p972 = pneg %p142
        $region42: #{tpu_custom_call.1} parent=31 // pred_check_branch
          %974 = sbr.rel (%p972) target = $region44
        $region43: #{tpu_custom_call.1} parent=31 // pred_region
          %s975 = smul.u32 4, %s23
          %977 = vsyncadd %s968, 0
          %s978 = smul.addr %s22, 4
          %s979 = sadd.s32 %s975, %s978
          %s980 = smul.addr %s979, 8
          %s981 = scalar_lea.hbm %s3, %s980
          %s983 = sshll.u32 %s971, 4
          %s984 = int_to_ptr.vmem [resolvable:$true] %s983
          %s985 = sshll.u32 %s981, 4
          %s986 = int_to_ptr.hbm [resolvable:$true] %s985
          %988 = dma.vmem_to_hbm [thread:$0]  %s984, 512, %s986, %s968
        $region44: #{tpu_custom_call.1} parent=31 // pred_fallthru
          _
      $region32: #{tpu_custom_call.1} parent=5 // pred_fallthru
        _
      %p989 = scmp.le.s32.totalorder 2, %s12
      // Predicated region
      $region45: #{tpu_custom_call.1} parent=5 // pred_check
        %p990 = pneg %p989
      $region46: #{tpu_custom_call.1} parent=5 // pred_check_branch
        %992 = sbr.rel (%p990) target = $region48
      $region47: #{tpu_custom_call.1} parent=5 // pred_region
        %s993 = ssub.s32 %s12, 2
        // Predicated region
        $region49: #{tpu_custom_call.1} parent=47 // pred_check
          %p994 = pneg %p148
        $region50: #{tpu_custom_call.1} parent=47 // pred_check_branch
          %996 = sbr.rel (%p994) target = $region52
        $region51: #{tpu_custom_call.1} parent=47 // pred_region
          %s997 = sand.u32 %s133, 1
          %s998 = scalar_lea.sflag [#allocation4], %s997
          %s999 = sand.u32 %s133, 1
          %s1000 = smul.addr %s999, 32
          %s1001 = scalar_lea.vmem [#allocation3], %s1000
          %1003 = dma.done %s998, 512
        $region52: #{tpu_custom_call.1} parent=47 // pred_fallthru
          _
      $region48: #{tpu_custom_call.1} parent=5 // pred_fallthru
        _
    $region6: #{tpu_custom_call.1} parent=1 // loop_footer
      %s16 = sadd.s32 1, %s12
    $region7: #{tpu_custom_call.1} parent=1 // loop_footer_branch
      %11 = sbr.rel target = $region3
    $region8: #{tpu_custom_call.1} parent=1 // loop_exit
      _
    %1004 = vsyncpa [#allocation4], 1
    %s1005 = scalar_lea.sflag [#allocation4], 1
    %1006 = vsyncpa %s1005, 1

</llo_original>
